<compile_context>
chip_gen: v7x
topology: tpu7x:2x2x1
jax: 0.10.0
libtpu: 0.0.40
codegen_flags: <defaults>
</compile_context>

<pallas_src>
import math

import jax
import jax.numpy as jnp
import numpy as np
from jax.experimental import pallas as pl
from jax.experimental.pallas import tpu as pltpu

HIDDEN = 32
GRAPHS = 2          # GlobalGraphRes holds two GlobalGraph blocks (behaves like 2 heads)
NEG_INF = -10000.0


def _cdiv(a, b):
    return -(-a // b)


# ------------------------------ kernel ---------------------------------------
def global_graph_res_kernel(lens_ref, x_ref, wqkv_ref, bqkv_ref, out_ref):
    bb, N, H = x_ref.shape
    hd = H // GRAPHS
    base = pl.program_id(0) * bb

    # ---- fused QKV projection for both graphs: one [bb*N, H] x [H, 3H] matmul ----
    xf = x_ref[...].reshape(bb * N, H)
    qkv = jnp.dot(xf, wqkv_ref[...], preferred_element_type=jnp.float32) + bqkv_ref[...]
    qkv = qkv.reshape(bb, N, 3 * H)

    # ---- additive attention mask built in-kernel from SMEM valid lengths ----
    # (iotas hoisted out of the loop; loop is static over a small bb)
    row = jax.lax.broadcasted_iota(jnp.int32, (N, N), 0)
    col = jax.lax.broadcasted_iota(jnp.int32, (N, N), 1)
    masks = []
    for i in range(bb):
        L = lens_ref[base + i]
        valid = jnp.logical_and(row < L, col < L)         # valid_i * valid_j outer product
        masks.append(jnp.where(valid, 0.0, NEG_INF).astype(jnp.float32))
    mask_add = jnp.stack(masks, axis=0)                   # [bb, N, N], shared by both graphs

    ctx = []
    for h in range(GRAPHS):                               # static loop over the two graphs
        # 1/sqrt(hd) already folded into the q columns of wqkv/bqkv at param-build time
        qh = qkv[:, :, h * hd:(h + 1) * hd]
        kh = qkv[:, :, H + h * hd:H + (h + 1) * hd]       # key projection (bias slot is zero)
        vh = qkv[:, :, 2 * H + h * hd:2 * H + (h + 1) * hd]
        s = jnp.einsum('bnd,bmd->bnm', qh, kh,
                       preferred_element_type=jnp.float32) + mask_add
        m = jnp.max(s, axis=-1, keepdims=True)
        e = jnp.exp(s - m)
        inv = pl.reciprocal(jnp.sum(e, axis=-1, keepdims=True))   # exact; one recip per row
        p = e * inv
        ctx.append(jnp.einsum('bnm,bmd->bnd', p, vh,
                              preferred_element_type=jnp.float32))
    # concat in graph order == torch.cat([gg1(x), gg2(x)], dim=-1)
    out_ref[...] = jnp.concatenate(ctx, axis=-1).astype(out_ref.dtype)


# ------------------------------ wrapper ---------------------------------------
def global_graph_res(hidden_states, valid_lens, wqkv, bqkv):
    B, N, H = hidden_states.shape

    # rows-per-step ~256 to fill MXU rows; keep >= 2 grid blocks when B >= 2 (v7x: 2 TensorCores)
    min_blocks = 2 if B >= 2 else 1
    nblocks = max(1, min(B, max(min_blocks, _cdiv(B * N, 256))))
    bb = _cdiv(B, nblocks)
    grid = _cdiv(B, bb)
    B_pad = grid * bb
    if B_pad != B:
        hidden_states = jnp.pad(hidden_states, ((0, B_pad - B), (0, 0), (0, 0)))
        valid_lens = jnp.pad(valid_lens, (0, B_pad - B))

    out = pl.pallas_call(
        global_graph_res_kernel,
        out_shape=jax.ShapeDtypeStruct((B_pad, N, H), jnp.float32),
        grid_spec=pltpu.PrefetchScalarGridSpec(
            num_scalar_prefetch=1,                          # valid_lens -> SMEM
            grid=(grid,),
            in_specs=[
                pl.BlockSpec((bb, N, H), lambda g, lens: (g, 0, 0)),   # hidden_states
                pl.BlockSpec((H, 3 * H), lambda g, lens: (0, 0)),      # fused W_qkv (in, out)
                pl.BlockSpec((1, 3 * H), lambda g, lens: (0, 0)),      # fused bias (k slot = 0)
            ],
            out_specs=pl.BlockSpec((bb, N, H), lambda g, lens: (g, 0, 0)),
        ),
        compiler_params=pltpu.CompilerParams(dimension_semantics=("parallel",)),
    )(valid_lens.astype(jnp.int32), hidden_states, wqkv, bqkv)
    return out[:B]


# -------------------------- parameter construction ----------------------------
def make_params(key, H):
    """Deterministic params. Torch layout: Linear weights are [out, in]."""
    hd = H // GRAPHS
    ks = jax.random.split(key, 10)
    bound = 1.0 / math.sqrt(H)

    def u(k, shape):
        return jax.random.uniform(k, shape, jnp.float32, minval=-bound, maxval=bound)

    wq1, bq1 = u(ks[0], (hd, H)), u(ks[1], (hd,))
    wk1 = u(ks[2], (hd, H))                      # key has no bias
    wv1, bv1 = u(ks[3], (hd, H)), u(ks[4], (hd,))
    wq2, bq2 = u(ks[5], (hd, H)), u(ks[6], (hd,))
    wk2 = u(ks[7], (hd, H))
    wv2, bv2 = u(ks[8], (hd, H)), u(ks[9], (hd,))
    torch_params = (wq1, bq1, wk1, wv1, bv1, wq2, bq2, wk2, wv2, bv2)

    # Kernel layout: fused [H, 3H] weight (transposed to [in, out]); columns = [q1|q2|k1|k2|v1|v2].
    # The attention score scale 1/sqrt(hd) is folded into the q weights/biases (free, done once).
    scale = 1.0 / math.sqrt(hd)
    wqkv = jnp.concatenate(
        [wq1.T * scale, wq2.T * scale, wk1.T, wk2.T, wv1.T, wv2.T], axis=1)
    bqkv = jnp.concatenate(
        [bq1 * scale, bq2 * scale, jnp.zeros((H,), jnp.float32), bv1, bv2]).reshape(1, 3 * H)
    return torch_params, (wqkv, bqkv)


# ---------------------------- pure-JAX reference -------------------------------
def reference(x, valid_lens, torch_params):
    (wq1, bq1, wk1, wv1, bv1, wq2, bq2, wk2, wv2, bv2) = torch_params
    B, N, H = x.shape
    hd = H // GRAPHS

    idx = jnp.arange(N)
    valid = (idx[None, :] < valid_lens[:, None]).astype(jnp.float32)   # [B, N]
    attention_mask = valid[:, :, None] * valid[:, None, :]             # [B, N, N]
    ext = (1.0 - attention_mask[:, None, :, :]) * -10000.0             # [B, 1, N, N]

    def global_graph(wq, bq, wk, wv, bv):
        q = (x @ wq.T + bq).reshape(B, N, 1, hd).transpose(0, 2, 1, 3)
        k = (x @ wk.T).reshape(B, N, 1, hd).transpose(0, 2, 1, 3)      # no key bias
        v = (x @ wv.T + bv).reshape(B, N, 1, hd).transpose(0, 2, 1, 3)
        s = (q / math.sqrt(hd)) @ jnp.swapaxes(k, -1, -2) + ext
        p = jax.nn.softmax(s, axis=-1)
        return (p @ v).transpose(0, 2, 1, 3).reshape(B, N, hd)

    return jnp.concatenate(
        [global_graph(wq1, bq1, wk1, wv1, bv1),
         global_graph(wq2, bq2, wk2, wv2, bv2)], axis=-1)


# ------------------------------------ main -------------------------------------
if __name__ == "__main__":
    B, N, H = 2, 8, HIDDEN
    key = jax.random.PRNGKey(0)
    k_x, k_p = jax.random.split(key)

    hidden_states = jax.random.normal(k_x, (B, N, H), jnp.float32)
    valid_lens = jnp.array([5, 8], dtype=jnp.int32)   # valid polyline counts per batch

    torch_params, (wqkv, bqkv) = make_params(k_p, H)

    out = global_graph_res(hidden_states, valid_lens, wqkv, bqkv)
    out = jax.block_until_ready(out)

    ref = reference(hidden_states, valid_lens, torch_params)
    np.testing.assert_allclose(np.asarray(out), np.asarray(ref), rtol=1e-4, atol=1e-4)

    print("KERNEL_OK")
</pallas_src>

<mosaic_0001>
module attributes {stable_mosaic.version = 11 : i64} {
  func.func @global_graph_res_kernel(%arg0: i32, %arg1: memref<2xi32, #tpu.memory_space<smem>>, %arg2: memref<1x8x32xf32, #tpu.memory_space<vmem>>, %arg3: memref<32x96xf32, #tpu.memory_space<vmem>>, %arg4: memref<1x96xf32, #tpu.memory_space<vmem>>, %arg5: memref<1x8x32xf32, #tpu.memory_space<vmem>>) attributes {dimension_semantics = [#tpu.dimension_semantics<parallel>], iteration_bounds = array<i64: 2>, scalar_prefetch = 1 : i64, scratch_operands = 0 : i64, tpu.core_type = #tpu.core_type<tc>, window_params = [{transform_indices = @transform_0, window_bounds = array<i64: 1, 8, 32>}, {pipeline_mode = #tpu.pipeline_mode<synchronous>, transform_indices = @transform_1, window_bounds = array<i64: 32, 96>}, {pipeline_mode = #tpu.pipeline_mode<synchronous>, transform_indices = @transform_2, window_bounds = array<i64: 1, 96>}, {transform_indices = @transform_3, window_bounds = array<i64: 1, 8, 32>}]} {
    %c1_i32 = arith.constant 1 : i32
    %0 = arith.muli %arg0, %c1_i32 : i32
    %c0 = arith.constant 0 : index
    %c0_0 = arith.constant 0 : index
    %c0_1 = arith.constant 0 : index
    %1 = vector.load %arg2[%c0, %c0_0, %c0_1] : memref<1x8x32xf32, #tpu.memory_space<vmem>>, vector<1x8x32xf32>
    %2 = vector.shape_cast %1 : vector<1x8x32xf32> to vector<8x32xf32>
    %c0_2 = arith.constant 0 : index
    %c0_3 = arith.constant 0 : index
    %3 = vector.load %arg3[%c0_2, %c0_3] : memref<32x96xf32, #tpu.memory_space<vmem>>, vector<32x96xf32>
    %cst = arith.constant dense<0.000000e+00> : vector<8x96xf32>
    %4 = tpu.matmul %2, %3, %cst {dimension_numbers = #tpu.dot_dimension_numbers<[1], [0], [0], [1], [0, 0, 1, 1], [], []>} : vector<8x32xf32>, vector<32x96xf32>, vector<8x96xf32> -> vector<8x96xf32>
    %c0_4 = arith.constant 0 : index
    %c0_5 = arith.constant 0 : index
    %5 = vector.load %arg4[%c0_4, %c0_5] : memref<1x96xf32, #tpu.memory_space<vmem>>, vector<1x96xf32>
    %6 = vector.broadcast %5 : vector<1x96xf32> to vector<8x96xf32>
    %7 = arith.addf %4, %6 : vector<8x96xf32>
    %8 = vector.shape_cast %7 : vector<8x96xf32> to vector<1x8x96xf32>
    %9 = tpu.iota {dimensions = array<i32: 0>} : vector<8x8xi32>
    %10 = tpu.iota {dimensions = array<i32: 1>} : vector<8x8xi32>
    %c0_i32 = arith.constant 0 : i32
    %11 = arith.addi %0, %c0_i32 : i32
    %12 = arith.index_cast %11 : i32 to index
    %13 = memref.load %arg1[%12] : memref<2xi32, #tpu.memory_space<smem>>
    %14 = vector.broadcast %13 : i32 to vector<8x8xi32>
    %15 = arith.cmpi slt, %9, %14 : vector<8x8xi32>
    %16 = vector.broadcast %13 : i32 to vector<8x8xi32>
    %17 = arith.cmpi slt, %10, %16 : vector<8x8xi32>
    %18 = arith.andi %15, %17 : vector<8x8xi1>
    %cst_6 = arith.constant 0.000000e+00 : f32
    %cst_7 = arith.constant -1.000000e+04 : f32
    %19 = vector.broadcast %cst_6 : f32 to vector<8x8xf32>
    %20 = vector.broadcast %cst_7 : f32 to vector<8x8xf32>
    %21 = arith.select %18, %19, %20 : vector<8x8xi1>, vector<8x8xf32>
    %22 = vector.shape_cast %21 : vector<8x8xf32> to vector<1x8x8xf32>
    %23 = vector.extract_strided_slice %8 {offsets = [0, 0, 0], sizes = [1, 8, 16], strides = [1, 1, 1]} : vector<1x8x96xf32> to vector<1x8x16xf32>
    %24 = vector.extract_strided_slice %8 {offsets = [0, 0, 32], sizes = [1, 8, 16], strides = [1, 1, 1]} : vector<1x8x96xf32> to vector<1x8x16xf32>
    %25 = vector.extract_strided_slice %8 {offsets = [0, 0, 64], sizes = [1, 8, 16], strides = [1, 1, 1]} : vector<1x8x96xf32> to vector<1x8x16xf32>
    "tpu.trace_start"() <{level = 10 : i32, message = "bnd,bmd->bnm"}> : () -> ()
    %cst_8 = arith.constant dense<0.000000e+00> : vector<1x8x8xf32>
    %26 = tpu.matmul %23, %24, %cst_8 {dimension_numbers = #tpu.dot_dimension_numbers<[2], [2], [1], [1], [0, 0, 0, 1, 1, 1], [0], [0]>} : vector<1x8x16xf32>, vector<1x8x16xf32>, vector<1x8x8xf32> -> vector<1x8x8xf32>
    "tpu.trace_stop"() : () -> ()
    %27 = arith.addf %26, %22 : vector<1x8x8xf32>
    %cst_9 = arith.constant dense<0xFF800000> : vector<1x8xf32>
    %28 = vector.multi_reduction <maximumf>, %27, %cst_9 [2] : vector<1x8x8xf32> to vector<1x8xf32>
    %29 = vector.shape_cast %28 : vector<1x8xf32> to vector<1x8x1xf32>
    %30 = vector.broadcast %29 : vector<1x8x1xf32> to vector<1x8x8xf32>
    %31 = arith.subf %27, %30 : vector<1x8x8xf32>
    %32 = math.exp %31 : vector<1x8x8xf32>
    %cst_10 = arith.constant dense<0.000000e+00> : vector<1x8xf32>
    %33 = vector.multi_reduction <add>, %32, %cst_10 [2] : vector<1x8x8xf32> to vector<1x8xf32>
    %34 = vector.shape_cast %33 : vector<1x8xf32> to vector<1x8x1xf32>
    %35 = tpu.reciprocal %34 : vector<1x8x1xf32> -> vector<1x8x1xf32>
    %36 = vector.broadcast %35 : vector<1x8x1xf32> to vector<1x8x8xf32>
    %37 = arith.mulf %32, %36 : vector<1x8x8xf32>
    "tpu.trace_start"() <{level = 10 : i32, message = "bnm,bmd->bnd"}> : () -> ()
    %cst_11 = arith.constant dense<0.000000e+00> : vector<1x8x16xf32>
    %38 = tpu.matmul %37, %25, %cst_11 {dimension_numbers = #tpu.dot_dimension_numbers<[2], [1], [1], [2], [0, 0, 0, 1, 1, 2], [0], [0]>} : vector<1x8x8xf32>, vector<1x8x16xf32>, vector<1x8x16xf32> -> vector<1x8x16xf32>
    "tpu.trace_stop"() : () -> ()
    %39 = vector.extract_strided_slice %8 {offsets = [0, 0, 16], sizes = [1, 8, 16], strides = [1, 1, 1]} : vector<1x8x96xf32> to vector<1x8x16xf32>
    %40 = vector.extract_strided_slice %8 {offsets = [0, 0, 48], sizes = [1, 8, 16], strides = [1, 1, 1]} : vector<1x8x96xf32> to vector<1x8x16xf32>
    %41 = vector.extract_strided_slice %8 {offsets = [0, 0, 80], sizes = [1, 8, 16], strides = [1, 1, 1]} : vector<1x8x96xf32> to vector<1x8x16xf32>
    "tpu.trace_start"() <{level = 10 : i32, message = "bnd,bmd->bnm"}> : () -> ()
    %cst_12 = arith.constant dense<0.000000e+00> : vector<1x8x8xf32>
    %42 = tpu.matmul %39, %40, %cst_12 {dimension_numbers = #tpu.dot_dimension_numbers<[2], [2], [1], [1], [0, 0, 0, 1, 1, 1], [0], [0]>} : vector<1x8x16xf32>, vector<1x8x16xf32>, vector<1x8x8xf32> -> vector<1x8x8xf32>
    "tpu.trace_stop"() : () -> ()
    %43 = arith.addf %42, %22 : vector<1x8x8xf32>
    %cst_13 = arith.constant dense<0xFF800000> : vector<1x8xf32>
    %44 = vector.multi_reduction <maximumf>, %43, %cst_13 [2] : vector<1x8x8xf32> to vector<1x8xf32>
    %45 = vector.shape_cast %44 : vector<1x8xf32> to vector<1x8x1xf32>
    %46 = vector.broadcast %45 : vector<1x8x1xf32> to vector<1x8x8xf32>
    %47 = arith.subf %43, %46 : vector<1x8x8xf32>
    %48 = math.exp %47 : vector<1x8x8xf32>
    %cst_14 = arith.constant dense<0.000000e+00> : vector<1x8xf32>
    %49 = vector.multi_reduction <add>, %48, %cst_14 [2] : vector<1x8x8xf32> to vector<1x8xf32>
    %50 = vector.shape_cast %49 : vector<1x8xf32> to vector<1x8x1xf32>
    %51 = tpu.reciprocal %50 : vector<1x8x1xf32> -> vector<1x8x1xf32>
    %52 = vector.broadcast %51 : vector<1x8x1xf32> to vector<1x8x8xf32>
    %53 = arith.mulf %48, %52 : vector<1x8x8xf32>
    "tpu.trace_start"() <{level = 10 : i32, message = "bnm,bmd->bnd"}> : () -> ()
    %cst_15 = arith.constant dense<0.000000e+00> : vector<1x8x16xf32>
    %54 = tpu.matmul %53, %41, %cst_15 {dimension_numbers = #tpu.dot_dimension_numbers<[2], [1], [1], [2], [0, 0, 0, 1, 1, 2], [0], [0]>} : vector<1x8x8xf32>, vector<1x8x16xf32>, vector<1x8x16xf32> -> vector<1x8x16xf32>
    "tpu.trace_stop"() : () -> ()
    %55 = tpu.concatenate %38, %54 in 2 : vector<1x8x16xf32>, vector<1x8x16xf32> -> vector<1x8x32xf32>
    %c0_16 = arith.constant 0 : index
    %c0_17 = arith.constant 0 : index
    %c0_18 = arith.constant 0 : index
    %56 = vector.load %arg5[%c0_16, %c0_17, %c0_18] : memref<1x8x32xf32, #tpu.memory_space<vmem>>, vector<1x8x32xf32>
    tpu.vector_store %arg5[%c0_16, %c0_17, %c0_18], %55 {strides = array<i32>} : memref<1x8x32xf32, #tpu.memory_space<vmem>>, vector<1x8x32xf32>,
    return
  }
  func.func @transform_0(%arg0: i32, %arg1: memref<2xi32, #tpu.memory_space<smem>>) -> (i32, i32, i32) {
    %c0_i32 = arith.constant 0 : i32
    %c0_i32_0 = arith.constant 0 : i32
    %c0_i32_1 = arith.constant 0 : i32
    return %arg0, %c0_i32, %c0_i32_0 : i32, i32, i32
  }
  func.func @transform_1(%arg0: i32, %arg1: memref<2xi32, #tpu.memory_space<smem>>) -> (i32, i32) {
    %c0_i32 = arith.constant 0 : i32
    %c0_i32_0 = arith.constant 0 : i32
    %c0_i32_1 = arith.constant 0 : i32
    return %c0_i32, %c0_i32_0 : i32, i32
  }
  func.func @transform_2(%arg0: i32, %arg1: memref<2xi32, #tpu.memory_space<smem>>) -> (i32, i32) {
    %c0_i32 = arith.constant 0 : i32
    %c0_i32_0 = arith.constant 0 : i32
    %c0_i32_1 = arith.constant 0 : i32
    return %c0_i32, %c0_i32_0 : i32, i32
  }
  func.func @transform_3(%arg0: i32, %arg1: memref<2xi32, #tpu.memory_space<smem>>) -> (i32, i32, i32) {
    %c0_i32 = arith.constant 0 : i32
    %c0_i32_0 = arith.constant 0 : i32
    %c0_i32_1 = arith.constant 0 : i32
    return %arg0, %c0_i32, %c0_i32_0 : i32, i32, i32
  }
}

</mosaic_0001>

<llo_original>
// kernel: tpu_custom_call.1
$region0: #{tpu_custom_call.1}
  #allocation0 [shape = 'u32[]', space=smem, size = 0x4, offset = 0x4, fixed_abs, tag = 'smem constant byte address 0x4 - core index']
  #allocation1 [shape = 'u32[144,128]{1,0:T(1,128)}', space=vmem, size = 0x12000, scoped, tag = 'internal scratch']
  #allocation2 [shape = 's32[1]{0}', space=sflag, size = 0x4, scoped, tag = 'scoped memory for tpu_custom_call.1']
  #allocation3 [shape = 'u8[512]{0}', space=smem, size = 0x200, scoped, tag = 'prefetched SMEM operand 0']
  %s0 = inlined_call_operand.hbm [shape: s32[2], index: 0, kind: input, shape index: {}]
  %s1 = inlined_call_operand.hbm [shape: f32[2,8,32], index: 1, kind: input, shape index: {}]
  %s2 = inlined_call_operand.hbm [shape: f32[32,96], index: 2, kind: input, shape index: {}]
  %s3 = inlined_call_operand.vmem [shape: f32[1,96], index: 3, kind: input, shape index: {}]
  %s4 = inlined_call_operand.hbm [shape: f32[2,8,32], index: 4, kind: output, shape index: {}]
  %s5 = sld [smem:[#allocation0]]
  $region53: #{tpu_custom_call.1} parent=0
    _
  %s7 = ssub.s32 1, %s5
  %s8 = scalar_select 0, %s7, %s5
  %10 = dma.hbm_to_smem %s0, 16, [#allocation3], [#allocation2]
  %11 = dma.done [#allocation2], 16
  %12 = sfence
  $region1: #{tpu_custom_call.1} parent=0
    #allocation4 [shape = 'u8[8192]{0}', space=vmem, size = 0x2000, scoped, tag = 'input window, operand 1']
    #allocation5 [shape = 's32[2]{0}', space=sflag, size = 0x8, scoped, tag = 'scoped memory for tpu_custom_call.1']
    #allocation6 [shape = 's32[2]{0}', space=sflag, size = 0x8, scoped, tag = 'scoped memory for tpu_custom_call.1']
    #allocation7 [shape = 'u8[16384]{0}', space=vmem, size = 0x4000, scoped, tag = 'input window, operand 2, single buffered']
    #allocation8 [shape = 's32[1]{0}', space=sflag, size = 0x4, scoped, tag = 'scoped memory for tpu_custom_call.1']
    #allocation9 [shape = 'u8[8192]{0}', space=vmem, size = 0x2000, scoped, tag = 'output window, operand 0']
    %13 = vsyncpa [#allocation5], 0
    %s14 = scalar_lea.sflag [#allocation5], 1
    %15 = vsyncpa %s14, 0
    %16 = vsyncpa [#allocation8], 0
    %17 = vsyncpa [#allocation6], 0
    %s18 = scalar_lea.sflag [#allocation6], 1
    %19 = vsyncpa %s18, 0
    loop: start=0, step=1, limit=4
    $region2: #{tpu_custom_call.1} parent=1 // loop_pre_header
      _
    $region3: #{tpu_custom_call.1} parent=1 // loop_header
      %s21 = sphi 0, %s25
      %p22 = scmp.ge.s32.totalorder %s21, 4
      %s31 = sphi 0, %s33
      %s34 = sphi 0, %s31
      %s35 = sphi 0, %s34
      %s51 = sphi 0, %s35
      %s55 = sphi 0, %s55
      %s57 = sphi 0, %s55
      %s58 = sphi 0, %s57
      %s72 = sphi 0, %s58
      %s76 = sphi 0, %s76
      %s78 = sphi 0, %s76
      %s79 = sphi 0, %s78
      %s93 = sphi 0, %s79
      %s99 = sphi 0, %s101
      %s102 = sphi 0, %s99
      %s103 = sphi 0, %s102
      %s119 = sphi 0, %s103
    $region4: #{tpu_custom_call.1} parent=1 // loop_header_branch
      %24 = sbr.rel (%p22) target = $region8
    $region5: #{tpu_custom_call.1} parent=1 // loop_body
      %s26 = ssub.s32 %s21, 1
      %s27 = ssub.s32 %s21, 2
      %s28 = sadd.s32 %s21, 1
      %s29 = ssub.s32 %s21, %s28
      %p30 = scmp.eq.s32.totalorder %s29, 0
      %s32 = sadd.s32 %s31, 1
      %s33 = scalar_select %p30, %s31, %s32
      %p36 = pneg %p30
      %p37 = scmp.eq.s32.totalorder %s21, 1
      %p38 = por %p36, %p37
      %p39 = scmp.ne.s32.totalorder %s31, %s34
      %p40 = scmp.eq.s32.totalorder %s21, 0
      %p41 = por %p39, %p40
      %p42 = scmp.ne.s32.totalorder %s31, %s34
      %p43 = scmp.eq.s32.totalorder %s26, 1
      %p44 = por %p42, %p43
      %p45 = scmp.ne.s32.totalorder %s34, %s35
      %p46 = scmp.eq.s32.totalorder %s26, 0
      %p47 = por %p45, %p46
      %p48 = scmp.ne.s32.totalorder %s34, %s35
      %p49 = scmp.eq.s32.totalorder %s27, 1
      %p50 = por %p48, %p49
      %p52 = scmp.ne.s32.totalorder %s35, %s51
      %p53 = scmp.eq.s32.totalorder %s27, 0
      %p54 = por %p52, %p53
      %s56 = sadd.s32 %s55, 1
      %p59 = scmp.eq.s32.totalorder %s21, 1
      %p60 = scmp.ne.s32.totalorder %s55, %s57
      %p61 = scmp.eq.s32.totalorder %s21, 0
      %p62 = por %p60, %p61
      %p63 = scmp.ne.s32.totalorder %s55, %s57
      %p64 = scmp.eq.s32.totalorder %s26, 1
      %p65 = por %p63, %p64
      %p66 = scmp.ne.s32.totalorder %s57, %s58
      %p67 = scmp.eq.s32.totalorder %s26, 0
      %p68 = por %p66, %p67
      %p69 = scmp.ne.s32.totalorder %s57, %s58
      %p70 = scmp.eq.s32.totalorder %s27, 1
      %p71 = por %p69, %p70
      %p73 = scmp.ne.s32.totalorder %s58, %s72
      %p74 = scmp.eq.s32.totalorder %s27, 0
      %p75 = por %p73, %p74
      %s77 = sadd.s32 %s76, 1
      %p80 = scmp.eq.s32.totalorder %s21, 1
      %p81 = scmp.ne.s32.totalorder %s76, %s78
      %p82 = scmp.eq.s32.totalorder %s21, 0
      %p83 = por %p81, %p82
      %p84 = scmp.ne.s32.totalorder %s76, %s78
      %p85 = scmp.eq.s32.totalorder %s26, 1
      %p86 = por %p84, %p85
      %p87 = scmp.ne.s32.totalorder %s78, %s79
      %p88 = scmp.eq.s32.totalorder %s26, 0
      %p89 = por %p87, %p88
      %p90 = scmp.ne.s32.totalorder %s78, %s79
      %p91 = scmp.eq.s32.totalorder %s27, 1
      %p92 = por %p90, %p91
      %p94 = scmp.ne.s32.totalorder %s79, %s93
      %p95 = scmp.eq.s32.totalorder %s27, 0
      %p96 = por %p94, %p95
      %s97 = ssub.s32 %s21, %s28
      %p98 = scmp.eq.s32.totalorder %s97, 0
      %s100 = sadd.s32 %s99, 1
      %s101 = scalar_select %p98, %s99, %s100
      %p104 = pneg %p98
      %p105 = scmp.eq.s32.totalorder %s21, 1
      %p106 = por %p104, %p105
      %p107 = scmp.ne.s32.totalorder %s99, %s102
      %p108 = scmp.eq.s32.totalorder %s21, 0
      %p109 = por %p107, %p108
      %p110 = scmp.ne.s32.totalorder %s99, %s102
      %p111 = scmp.eq.s32.totalorder %s26, 1
      %p112 = por %p110, %p111
      %p113 = scmp.ne.s32.totalorder %s102, %s103
      %p114 = scmp.eq.s32.totalorder %s26, 0
      %p115 = por %p113, %p114
      %p116 = scmp.ne.s32.totalorder %s102, %s103
      %p117 = scmp.eq.s32.totalorder %s27, 1
      %p118 = por %p116, %p117
      %p120 = scmp.ne.s32.totalorder %s103, %s119
      %p121 = scmp.eq.s32.totalorder %s27, 0
      %p122 = por %p120, %p121
      %p123 = scmp.le.s32.totalorder 1, %s21
      %p124 = scmp.lt.s32.totalorder %s21, 3
      %p125 = pnand %p123, %p124
      %p126 = pneg %p125
      // Predicated region
      $region9: #{tpu_custom_call.1} parent=5 // pred_check
        _
      $region10: #{tpu_custom_call.1} parent=5 // pred_check_branch
        %128 = sbr.rel (%p125) target = $region12
      $region11: #{tpu_custom_call.1} parent=5 // pred_region
        %s129 = ssub.s32 %s21, 1
        // Predicated region
        $region13: #{tpu_custom_call.1} parent=11 // pred_check
          %p130 = pneg %p68
        $region14: #{tpu_custom_call.1} parent=11 // pred_check_branch
          %132 = sbr.rel (%p130) target = $region16
        $region15: #{tpu_custom_call.1} parent=11 // pred_region
          %s134 = ssub.s32 512, 512
          %135 = vsyncadd [#allocation8], %s134
          %s136 = sshll.u32 [#allocation7], 4
          %s137 = int_to_ptr.vmem [resolvable:$true] %s136
          %142 = dma.hbm_to_vmem [thread:$0]  %s2, 512, %s137, [#allocation8], 128, 128, 8
        $region16: #{tpu_custom_call.1} parent=11 // pred_fallthru
          _
        // Predicated region
        $region17: #{tpu_custom_call.1} parent=11 // pred_check
          %p143 = pneg %p89
        $region18: #{tpu_custom_call.1} parent=11 // pred_check_branch
          %145 = sbr.rel (%p143) target = $region20
        $region19: #{tpu_custom_call.1} parent=11 // pred_region
          _
        $region20: #{tpu_custom_call.1} parent=11 // pred_fallthru
          _
      $region12: #{tpu_custom_call.1} parent=5 // pred_fallthru
        _
      %p146 = scmp.lt.s32.totalorder %s21, 2
      // Predicated region
      $region21: #{tpu_custom_call.1} parent=5 // pred_check
        %p147 = pneg %p146
      $region22: #{tpu_custom_call.1} parent=5 // pred_check_branch
        %149 = sbr.rel (%p147) target = $region24
      $region23: #{tpu_custom_call.1} parent=5 // pred_region
        // Predicated region
        $region25: #{tpu_custom_call.1} parent=23 // pred_check
          %p150 = pneg %p41
        $region26: #{tpu_custom_call.1} parent=23 // pred_check_branch
          %152 = sbr.rel (%p150) target = $region28
        $region27: #{tpu_custom_call.1} parent=23 // pred_region
          %s153 = sand.u32 %s31, 1
          %s154 = scalar_lea.sflag [#allocation5], %s153
          %s155 = sand.u32 %s31, 1
          %s156 = smul.addr %s155, 8
          %s157 = scalar_lea.vmem [#allocation4], %s156
          %s159 = ssub.s32 128, 128
          %160 = vsyncadd %s154, %s159
          %s161 = smul.addr %s21, 128
          %s162 = scalar_lea.hbm %s1, %s161
          %s164 = sshll.u32 %s157, 4
          %s165 = int_to_ptr.vmem [resolvable:$true] %s164
          %167 = dma.hbm_to_vmem [thread:$0]  %s162, 128, %s165, %s154
        $region28: #{tpu_custom_call.1} parent=23 // pred_fallthru
          _
      $region24: #{tpu_custom_call.1} parent=5 // pred_fallthru
        _
      %p168 = scmp.le.s32.totalorder 1, %s21
      %p169 = scmp.lt.s32.totalorder %s21, 3
      %p170 = pnand %p168, %p169
      %p171 = pneg %p170
      // Predicated region
      $region29: #{tpu_custom_call.1} parent=5 // pred_check
        _
      $region30: #{tpu_custom_call.1} parent=5 // pred_check_branch
        %173 = sbr.rel (%p170) target = $region32
      $region31: #{tpu_custom_call.1} parent=5 // pred_region
        %s174 = ssub.s32 %s21, 1
        %s175 = sand.u32 %s34, 1
        %s176 = scalar_lea.sflag [#allocation5], %s175
        %s177 = sand.u32 %s34, 1
        %s178 = smul.addr %s177, 8
        %s179 = scalar_lea.vmem [#allocation4], %s178
        // Predicated region
        $region33: #{tpu_custom_call.1} parent=31 // pred_check
          %p180 = pneg %p47
        $region34: #{tpu_custom_call.1} parent=31 // pred_check_branch
          %182 = sbr.rel (%p180) target = $region36
        $region35: #{tpu_custom_call.1} parent=31 // pred_region
          %183 = dma.done %s176, 128
        $region36: #{tpu_custom_call.1} parent=31 // pred_fallthru
          _
        // Predicated region
        $region37: #{tpu_custom_call.1} parent=31 // pred_check
          %p184 = pneg %p68
        $region38: #{tpu_custom_call.1} parent=31 // pred_check_branch
          %186 = sbr.rel (%p184) target = $region40
        $region39: #{tpu_custom_call.1} parent=31 // pred_region
          %187 = dma.done [#allocation8], 512
        $region40: #{tpu_custom_call.1} parent=31 // pred_fallthru
          _
        %s188 = sand.u32 %s34, 1
        %s189 = scalar_lea.sflag [#allocation5], %s188
        %s190 = sand.u32 %s34, 1
        %s191 = smul.addr %s190, 8
        %s192 = scalar_lea.vmem [#allocation4], %s191
        %p193 = pneg %p47
        %p194 = pneg %p44
        %p195 = pneg %p68
        %p196 = pneg %p65
        %p197 = pneg %p89
        %p198 = pneg %p86
        %p199 = pneg %p115
        %p200 = pneg %p112
        %s201 = sand.u32 %s102, 1
        %s202 = scalar_lea.sflag [#allocation6], %s201
        %s203 = sand.u32 %s102, 1
        %s204 = smul.addr %s203, 8
        %s205 = scalar_lea.vmem [#allocation9], %s204
        %v206 = vld [vmem:[%s179] sm:$0xff]
        %v207 = vld [vmem:[#allocation7] sm:$0xff]
        %v208 = vld [vmem:[#allocation7 + $0x8] sm:$0xff]
        %v209 = vld [vmem:[#allocation7 + $0x10] sm:$0xff]
        %v210 = vld [vmem:[#allocation7 + $0x18] sm:$0xff]
        %v211 = vld [vmem:[%s3] sm:$0x1]
        %v213 = vlaneseq
        %v214 = vshrl.u32 %v213, 7
        %v215 = vsub.s32 0, %v214
        %v216 = vrot.slane %v211, %v215
        %vm218 = vcmask 261120
        %v220 = vsel %vm218, %v206, 0
        %222 = vmatprep.subr.mxu0 0.0
        %223 = vmatpush1.msra.mxu0 %v207
        %224 = vmatprep.subr.mxu0 0.0
        %225 = vmatpush1.msra.mxu0 %v208
        %226 = vmatprep.subr.mxu0 0.0
        %227 = vmatpush1.msra.mxu0 %v209
        %228 = vmatprep.subr.mxu0 0.0
        %229 = vmatpush1.msra.mxu0 %v210
        %230 = vmatprep.subr.mxu0 0.0
        %231 = vmatpush1.msra.mxu0 0.0
        %232 = vmatprep.subr.mxu0 0.0
        %233 = vmatpush1.msra.mxu0 0.0
        %234 = vmatprep.subr.mxu0 0.0
        %235 = vmatpush1.msra.mxu0 0.0
        %236 = vmatprep.subr.mxu0 0.0
        %237 = vmatpush1.msra.mxu0 0.0
        %238 = vmatprep.subr.mxu0 0.0
        %239 = vmatpush1.msra.mxu0 0.0
        %240 = vmatprep.subr.mxu0 0.0
        %241 = vmatpush1.msra.mxu0 0.0
        %242 = vmatprep.subr.mxu0 0.0
        %243 = vmatpush1.msra.mxu0 0.0
        %244 = vmatprep.subr.mxu0 0.0
        %245 = vmatpush1.msra.mxu0 0.0
        %246 = vmatprep.subr.mxu0 0.0
        %247 = vmatpush1.msra.mxu0 0.0
        %248 = vmatprep.subr.mxu0 0.0
        %249 = vmatpush1.msra.mxu0 0.0
        %250 = vmatprep.subr.mxu0 0.0
        %251 = vmatpush1.msra.mxu0 0.0
        %252 = vmatprep.subr.mxu0 0.0
        %253 = vmatpush1.msra.mxu0 0.0
        %254 = vmatprep.subr.mxu0 0.0
        %255 = vmatpush1.msra.mxu0 0.0
        %256 = vmatprep.subr.mxu0 0.0
        %257 = vmatpush1.msra.mxu0 0.0
        %258 = vmatprep.subr.mxu0 0.0
        %259 = vmatpush1.msra.mxu0 0.0
        %260 = vmatprep.subr.mxu0 0.0
        %261 = vmatpush1.msra.mxu0 0.0
        %262 = vmatprep.subr.mxu0 0.0
        %263 = vmatpush1.msra.mxu0 0.0
        %264 = vmatprep.subr.mxu0 0.0
        %265 = vmatpush1.msra.mxu0 0.0
        %266 = vmatprep.subr.mxu0 0.0
        %267 = vmatpush1.msra.mxu0 0.0
        %268 = vmatprep.subr.mxu0 0.0
        %269 = vmatpush1.msra.mxu0 0.0
        %270 = vmatprep.subr.mxu0 0.0
        %271 = vmatpush1.msra.mxu0 0.0
        %272 = vmatprep.subr.mxu0 0.0
        %273 = vmatpush1.msra.mxu0 0.0
        %274 = vmatprep.subr.mxu0 0.0
        %275 = vmatpush1.msra.mxu0 0.0
        %276 = vmatprep.subr.mxu0 0.0
        %277 = vmatpush1.msra.mxu0 0.0
        %278 = vmatprep.subr.mxu0 0.0
        %279 = vmatpush1.msra.mxu0 0.0
        %280 = vmatprep.subr.mxu0 0.0
        %281 = vmatpush1.msra.mxu0 0.0
        %282 = vmatprep.subr.mxu0 0.0
        %283 = vmatpush1.msra.mxu0 0.0
        %284 = vmatprep.subr.mxu0 0.0
        %285 = vmatpush1.msra.mxu0 0.0
        %286 = vmatprep.mubr.f32.mxu0 0.0
        %287 = vmatmul.mubr.f32.gmra.mrb[0].mxu0 %v220
        %v288 = vpop.f32.mrb[0].mxu0
        %v289 = vadd.f32 %v216, %v288
        %v290 = vpop.f32.mrb[0].mxu0
        %291 = vdwg.mxu0
        %v292 = vlaneseq
        %v293 = vshrl.u32 %v292, 7
        %v294 = vlaneseq
        %v295 = vand.u32 %v294, 127
        %s296 = sld [smem:[#allocation3 + %s26]]
        %v297 = vstv %s296
        %vm298 = vcmp.lt.s32.totalorder %v293, %v297
        %vm299 = vcmp.lt.s32.totalorder %v295, %v297
        %vm300 = vmand %vm298, %vm299
        %v301 = vsel %vm300, 0.0, -10000.0
        %303 = vrot.lane.b32.xlu0 %v289, 96
        %v304 = vpop.permute.xlu0 %303
        %vm305 = vcmask 130048
        %v306 = vsel %vm305, %v289, 0
        %v308 = vsel %vm305, %v304, 0
        %310 = vmatprep.subr.mxu0 0.0
        %311 = vmatpush1.xpose.msra.mxu0 %v308
        %312 = vmatprep.subr.mxu0 0.0
        %313 = vmatpush1.xpose.msra.mxu0 0.0
        %314 = vmatprep.subr.mxu0 0.0
        %315 = vmatpush1.xpose.msra.mxu0 0.0
        %316 = vmatprep.subr.mxu0 0.0
        %317 = vmatpush1.xpose.msra.mxu0 0.0
        %318 = vmatprep.subr.mxu0 0.0
        %319 = vmatpush1.xpose.msra.mxu0 0.0
        %320 = vmatprep.subr.mxu0 0.0
        %321 = vmatpush1.xpose.msra.mxu0 0.0
        %322 = vmatprep.subr.mxu0 0.0
        %323 = vmatpush1.xpose.msra.mxu0 0.0
        %324 = vmatprep.subr.mxu0 0.0
        %325 = vmatpush1.xpose.msra.mxu0 0.0
        %326 = vmatprep.subr.mxu0 0.0
        %327 = vmatpush1.xpose.msra.mxu0 0.0
        %328 = vmatprep.subr.mxu0 0.0
        %329 = vmatpush1.xpose.msra.mxu0 0.0
        %330 = vmatprep.subr.mxu0 0.0
        %331 = vmatpush1.xpose.msra.mxu0 0.0
        %332 = vmatprep.subr.mxu0 0.0
        %333 = vmatpush1.xpose.msra.mxu0 0.0
        %334 = vmatprep.subr.mxu0 0.0
        %335 = vmatpush1.xpose.msra.mxu0 0.0
        %336 = vmatprep.subr.mxu0 0.0
        %337 = vmatpush1.xpose.msra.mxu0 0.0
        %338 = vmatprep.subr.mxu0 0.0
        %339 = vmatpush1.xpose.msra.mxu0 0.0
        %340 = vmatprep.subr.mxu0 0.0
        %341 = vmatpush1.xpose.msra.mxu0 0.0
        %342 = vmatprep.subr.mxu0 0.0
        %343 = vmatpush1.xpose.msra.mxu0 0.0
        %344 = vmatprep.subr.mxu0 0.0
        %345 = vmatpush1.xpose.msra.mxu0 0.0
        %346 = vmatprep.subr.mxu0 0.0
        %347 = vmatpush1.xpose.msra.mxu0 0.0
        %348 = vmatprep.subr.mxu0 0.0
        %349 = vmatpush1.xpose.msra.mxu0 0.0
        %350 = vmatprep.subr.mxu0 0.0
        %351 = vmatpush1.xpose.msra.mxu0 0.0
        %352 = vmatprep.subr.mxu0 0.0
        %353 = vmatpush1.xpose.msra.mxu0 0.0
        %354 = vmatprep.subr.mxu0 0.0
        %355 = vmatpush1.xpose.msra.mxu0 0.0
        %356 = vmatprep.subr.mxu0 0.0
        %357 = vmatpush1.xpose.msra.mxu0 0.0
        %358 = vmatprep.subr.mxu0 0.0
        %359 = vmatpush1.xpose.msra.mxu0 0.0
        %360 = vmatprep.subr.mxu0 0.0
        %361 = vmatpush1.xpose.msra.mxu0 0.0
        %362 = vmatprep.subr.mxu0 0.0
        %363 = vmatpush1.xpose.msra.mxu0 0.0
        %364 = vmatprep.subr.mxu0 0.0
        %365 = vmatpush1.xpose.msra.mxu0 0.0
        %366 = vmatprep.subr.mxu0 0.0
        %367 = vmatpush1.xpose.msra.mxu0 0.0
        %368 = vmatprep.subr.mxu0 0.0
        %369 = vmatpush1.xpose.msra.mxu0 0.0
        %370 = vmatprep.subr.mxu0 0.0
        %371 = vmatpush1.xpose.msra.mxu0 0.0
        %372 = vmatprep.subr.mxu0 0.0
        %373 = vmatpush1.xpose.msra.mxu0 0.0
        %374 = vmatprep.mubr.f32.mxu0 0.0
        %375 = vmatmul.mubr.f32.gmra.mrb[0].mxu0 %v306
        %v376 = vpop.f32.mrb[0].mxu0
        %v377 = vadd.f32 %v301, %v376
        %v378 = vpop.f32.mrb[0].mxu0
        %379 = vdwg.mxu0
        %vm380 = vcmask 64512
        %v381 = vsel %vm380, %v377, -inf
        %382 = vmax.xlane.f32.xlu0 %v381
        %v383 = vpop.xlane.xlu0 %382
        %v384 = vsub.f32 %v377, %v383
        %v385 = vmul.f32 %v384, 1.442695
        %v386 = vpow.pop %v385
        %v387 = vsel %vm380, %v386, 0.0
        %388 = vadd.xlane.f32.xlu0 %v387
        %v389 = vpop.xlane.xlu0 %388
        %v390 = vrcp.pop %v389
        %v391 = vmul.f32 %v386, %v390
        %392 = vrot.lane.b32.xlu0 %v289, 64
        %v393 = vpop.permute.xlu0 %392
        %v396 = vsel %vm380, %v391, 0
        %398 = vmatprep.subr.mxu0 0.0
        %399 = vmatpush1.msra.mxu0 %v393
        %400 = vmatprep.subr.mxu0 0.0
        %401 = vmatpush1.msra.mxu0 0.0
        %402 = vmatprep.subr.mxu0 0.0
        %403 = vmatpush1.msra.mxu0 0.0
        %404 = vmatprep.subr.mxu0 0.0
        %405 = vmatpush1.msra.mxu0 0.0
        %406 = vmatprep.subr.mxu0 0.0
        %407 = vmatpush1.msra.mxu0 0.0
        %408 = vmatprep.subr.mxu0 0.0
        %409 = vmatpush1.msra.mxu0 0.0
        %410 = vmatprep.subr.mxu0 0.0
        %411 = vmatpush1.msra.mxu0 0.0
        %412 = vmatprep.subr.mxu0 0.0
        %413 = vmatpush1.msra.mxu0 0.0
        %414 = vmatprep.subr.mxu0 0.0
        %415 = vmatpush1.msra.mxu0 0.0
        %416 = vmatprep.subr.mxu0 0.0
        %417 = vmatpush1.msra.mxu0 0.0
        %418 = vmatprep.subr.mxu0 0.0
        %419 = vmatpush1.msra.mxu0 0.0
        %420 = vmatprep.subr.mxu0 0.0
        %421 = vmatpush1.msra.mxu0 0.0
        %422 = vmatprep.subr.mxu0 0.0
        %423 = vmatpush1.msra.mxu0 0.0
        %424 = vmatprep.subr.mxu0 0.0
        %425 = vmatpush1.msra.mxu0 0.0
        %426 = vmatprep.subr.mxu0 0.0
        %427 = vmatpush1.msra.mxu0 0.0
        %428 = vmatprep.subr.mxu0 0.0
        %429 = vmatpush1.msra.mxu0 0.0
        %430 = vmatprep.subr.mxu0 0.0
        %431 = vmatpush1.msra.mxu0 0.0
        %432 = vmatprep.subr.mxu0 0.0
        %433 = vmatpush1.msra.mxu0 0.0
        %434 = vmatprep.subr.mxu0 0.0
        %435 = vmatpush1.msra.mxu0 0.0
        %436 = vmatprep.subr.mxu0 0.0
        %437 = vmatpush1.msra.mxu0 0.0
        %438 = vmatprep.subr.mxu0 0.0
        %439 = vmatpush1.msra.mxu0 0.0
        %440 = vmatprep.subr.mxu0 0.0
        %441 = vmatpush1.msra.mxu0 0.0
        %442 = vmatprep.subr.mxu0 0.0
        %443 = vmatpush1.msra.mxu0 0.0
        %444 = vmatprep.subr.mxu0 0.0
        %445 = vmatpush1.msra.mxu0 0.0
        %446 = vmatprep.subr.mxu0 0.0
        %447 = vmatpush1.msra.mxu0 0.0
        %448 = vmatprep.subr.mxu0 0.0
        %449 = vmatpush1.msra.mxu0 0.0
        %450 = vmatprep.subr.mxu0 0.0
        %451 = vmatpush1.msra.mxu0 0.0
        %452 = vmatprep.subr.mxu0 0.0
        %453 = vmatpush1.msra.mxu0 0.0
        %454 = vmatprep.subr.mxu0 0.0
        %455 = vmatpush1.msra.mxu0 0.0
        %456 = vmatprep.subr.mxu0 0.0
        %457 = vmatpush1.msra.mxu0 0.0
        %458 = vmatprep.subr.mxu0 0.0
        %459 = vmatpush1.msra.mxu0 0.0
        %460 = vmatprep.subr.mxu0 0.0
        %461 = vmatpush1.msra.mxu0 0.0
        %462 = vmatprep.mubr.f32.mxu0 0.0
        %463 = vmatmul.mubr.f32.gmra.mrb[0].mxu0 %v396
        %v464 = vpop.f32.mrb[0].mxu0
        %v465 = vadd.f32 0.0, %v464
        %v466 = vpop.f32.mrb[0].mxu0
        %467 = vdwg.mxu0
        %468 = vrot.lane.b32.xlu0 %v289, 112
        %v469 = vpop.permute.xlu0 %468
        %470 = vrot.lane.b32.xlu0 %v289, 80
        %v471 = vpop.permute.xlu0 %470
        %v472 = vsel %vm305, %v469, 0
        %v474 = vsel %vm305, %v471, 0
        %476 = vmatprep.subr.mxu0 0.0
        %477 = vmatpush1.xpose.msra.mxu0 %v474
        %478 = vmatprep.subr.mxu0 0.0
        %479 = vmatpush1.xpose.msra.mxu0 0.0
        %480 = vmatprep.subr.mxu0 0.0
        %481 = vmatpush1.xpose.msra.mxu0 0.0
        %482 = vmatprep.subr.mxu0 0.0
        %483 = vmatpush1.xpose.msra.mxu0 0.0
        %484 = vmatprep.subr.mxu0 0.0
        %485 = vmatpush1.xpose.msra.mxu0 0.0
        %486 = vmatprep.subr.mxu0 0.0
        %487 = vmatpush1.xpose.msra.mxu0 0.0
        %488 = vmatprep.subr.mxu0 0.0
        %489 = vmatpush1.xpose.msra.mxu0 0.0
        %490 = vmatprep.subr.mxu0 0.0
        %491 = vmatpush1.xpose.msra.mxu0 0.0
        %492 = vmatprep.subr.mxu0 0.0
        %493 = vmatpush1.xpose.msra.mxu0 0.0
        %494 = vmatprep.subr.mxu0 0.0
        %495 = vmatpush1.xpose.msra.mxu0 0.0
        %496 = vmatprep.subr.mxu0 0.0
        %497 = vmatpush1.xpose.msra.mxu0 0.0
        %498 = vmatprep.subr.mxu0 0.0
        %499 = vmatpush1.xpose.msra.mxu0 0.0
        %500 = vmatprep.subr.mxu0 0.0
        %501 = vmatpush1.xpose.msra.mxu0 0.0
        %502 = vmatprep.subr.mxu0 0.0
        %503 = vmatpush1.xpose.msra.mxu0 0.0
        %504 = vmatprep.subr.mxu0 0.0
        %505 = vmatpush1.xpose.msra.mxu0 0.0
        %506 = vmatprep.subr.mxu0 0.0
        %507 = vmatpush1.xpose.msra.mxu0 0.0
        %508 = vmatprep.subr.mxu0 0.0
        %509 = vmatpush1.xpose.msra.mxu0 0.0
        %510 = vmatprep.subr.mxu0 0.0
        %511 = vmatpush1.xpose.msra.mxu0 0.0
        %512 = vmatprep.subr.mxu0 0.0
        %513 = vmatpush1.xpose.msra.mxu0 0.0
        %514 = vmatprep.subr.mxu0 0.0
        %515 = vmatpush1.xpose.msra.mxu0 0.0
        %516 = vmatprep.subr.mxu0 0.0
        %517 = vmatpush1.xpose.msra.mxu0 0.0
        %518 = vmatprep.subr.mxu0 0.0
        %519 = vmatpush1.xpose.msra.mxu0 0.0
        %520 = vmatprep.subr.mxu0 0.0
        %521 = vmatpush1.xpose.msra.mxu0 0.0
        %522 = vmatprep.subr.mxu0 0.0
        %523 = vmatpush1.xpose.msra.mxu0 0.0
        %524 = vmatprep.subr.mxu0 0.0
        %525 = vmatpush1.xpose.msra.mxu0 0.0
        %526 = vmatprep.subr.mxu0 0.0
        %527 = vmatpush1.xpose.msra.mxu0 0.0
        %528 = vmatprep.subr.mxu0 0.0
        %529 = vmatpush1.xpose.msra.mxu0 0.0
        %530 = vmatprep.subr.mxu0 0.0
        %531 = vmatpush1.xpose.msra.mxu0 0.0
        %532 = vmatprep.subr.mxu0 0.0
        %533 = vmatpush1.xpose.msra.mxu0 0.0
        %534 = vmatprep.subr.mxu0 0.0
        %535 = vmatpush1.xpose.msra.mxu0 0.0
        %536 = vmatprep.subr.mxu0 0.0
        %537 = vmatpush1.xpose.msra.mxu0 0.0
        %538 = vmatprep.subr.mxu0 0.0
        %539 = vmatpush1.xpose.msra.mxu0 0.0
        %540 = vmatprep.mubr.f32.mxu0 0.0
        %541 = vmatmul.mubr.f32.gmra.mrb[0].mxu0 %v472
        %v542 = vpop.f32.mrb[0].mxu0
        %v543 = vadd.f32 %v301, %v542
        %v544 = vpop.f32.mrb[0].mxu0
        %545 = vdwg.mxu0
        %v546 = vsel %vm380, %v543, -inf
        %547 = vmax.xlane.f32.xlu0 %v546
        %v548 = vpop.xlane.xlu0 %547
        %v549 = vsub.f32 %v543, %v548
        %v550 = vmul.f32 %v549, 1.442695
        %v551 = vpow.pop %v550
        %v552 = vsel %vm380, %v551, 0.0
        %553 = vadd.xlane.f32.xlu0 %v552
        %v554 = vpop.xlane.xlu0 %553
        %v555 = vrcp.pop %v554
        %v556 = vmul.f32 %v551, %v555
        %557 = vrot.lane.b32.xlu0 %v289, 48
        %v558 = vpop.permute.xlu0 %557
        %v561 = vsel %vm380, %v556, 0
        %563 = vmatprep.subr.mxu0 0.0
        %564 = vmatpush1.msra.mxu0 %v558
        %565 = vmatprep.subr.mxu0 0.0
        %566 = vmatpush1.msra.mxu0 0.0
        %567 = vmatprep.subr.mxu0 0.0
        %568 = vmatpush1.msra.mxu0 0.0
        %569 = vmatprep.subr.mxu0 0.0
        %570 = vmatpush1.msra.mxu0 0.0
        %571 = vmatprep.subr.mxu0 0.0
        %572 = vmatpush1.msra.mxu0 0.0
        %573 = vmatprep.subr.mxu0 0.0
        %574 = vmatpush1.msra.mxu0 0.0
        %575 = vmatprep.subr.mxu0 0.0
        %576 = vmatpush1.msra.mxu0 0.0
        %577 = vmatprep.subr.mxu0 0.0
        %578 = vmatpush1.msra.mxu0 0.0
        %579 = vmatprep.subr.mxu0 0.0
        %580 = vmatpush1.msra.mxu0 0.0
        %581 = vmatprep.subr.mxu0 0.0
        %582 = vmatpush1.msra.mxu0 0.0
        %583 = vmatprep.subr.mxu0 0.0
        %584 = vmatpush1.msra.mxu0 0.0
        %585 = vmatprep.subr.mxu0 0.0
        %586 = vmatpush1.msra.mxu0 0.0
        %587 = vmatprep.subr.mxu0 0.0
        %588 = vmatpush1.msra.mxu0 0.0
        %589 = vmatprep.subr.mxu0 0.0
        %590 = vmatpush1.msra.mxu0 0.0
        %591 = vmatprep.subr.mxu0 0.0
        %592 = vmatpush1.msra.mxu0 0.0
        %593 = vmatprep.subr.mxu0 0.0
        %594 = vmatpush1.msra.mxu0 0.0
        %595 = vmatprep.subr.mxu0 0.0
        %596 = vmatpush1.msra.mxu0 0.0
        %597 = vmatprep.subr.mxu0 0.0
        %598 = vmatpush1.msra.mxu0 0.0
        %599 = vmatprep.subr.mxu0 0.0
        %600 = vmatpush1.msra.mxu0 0.0
        %601 = vmatprep.subr.mxu0 0.0
        %602 = vmatpush1.msra.mxu0 0.0
        %603 = vmatprep.subr.mxu0 0.0
        %604 = vmatpush1.msra.mxu0 0.0
        %605 = vmatprep.subr.mxu0 0.0
        %606 = vmatpush1.msra.mxu0 0.0
        %607 = vmatprep.subr.mxu0 0.0
        %608 = vmatpush1.msra.mxu0 0.0
        %609 = vmatprep.subr.mxu0 0.0
        %610 = vmatpush1.msra.mxu0 0.0
        %611 = vmatprep.subr.mxu0 0.0
        %612 = vmatpush1.msra.mxu0 0.0
        %613 = vmatprep.subr.mxu0 0.0
        %614 = vmatpush1.msra.mxu0 0.0
        %615 = vmatprep.subr.mxu0 0.0
        %616 = vmatpush1.msra.mxu0 0.0
        %617 = vmatprep.subr.mxu0 0.0
        %618 = vmatpush1.msra.mxu0 0.0
        %619 = vmatprep.subr.mxu0 0.0
        %620 = vmatpush1.msra.mxu0 0.0
        %621 = vmatprep.subr.mxu0 0.0
        %622 = vmatpush1.msra.mxu0 0.0
        %623 = vmatprep.subr.mxu0 0.0
        %624 = vmatpush1.msra.mxu0 0.0
        %625 = vmatprep.subr.mxu0 0.0
        %626 = vmatpush1.msra.mxu0 0.0
        %627 = vmatprep.mubr.f32.mxu0 0.0
        %628 = vmatmul.mubr.f32.gmra.mrb[0].mxu0 %v561
        %v629 = vpop.f32.mrb[0].mxu0
        %v630 = vadd.f32 0.0, %v629
        %v631 = vpop.f32.mrb[0].mxu0
        %632 = vdwg.mxu0
        %634 = vrot.lane.b32.xlu0 %v630, 16
        %v635 = vpop.permute.xlu0 %634
        %v637 = vsel %vm305, %v465, %v635
        %638 = vst.msk [vmem:[%s205] sm:$0xff] %vm218, %v637
        %s639 = sand.u32 %s102, 1
        %s640 = scalar_lea.sflag [#allocation6], %s639
        %s641 = sand.u32 %s102, 1
        %s642 = smul.addr %s641, 8
        %s643 = scalar_lea.vmem [#allocation9], %s642
        // Predicated region
        $region41: #{tpu_custom_call.1} parent=31 // pred_check
          %p644 = pneg %p112
        $region42: #{tpu_custom_call.1} parent=31 // pred_check_branch
          %646 = sbr.rel (%p644) target = $region44
        $region43: #{tpu_custom_call.1} parent=31 // pred_region
          %s648 = ssub.s32 128, 128
          %649 = vsyncadd %s640, %s648
          %s650 = smul.addr %s26, 128
          %s651 = scalar_lea.hbm %s4, %s650
          %s653 = sshll.u32 %s643, 4
          %s654 = int_to_ptr.vmem [resolvable:$true] %s653
          %656 = dma.vmem_to_hbm [thread:$0]  %s654, 128, %s651, %s640
        $region44: #{tpu_custom_call.1} parent=31 // pred_fallthru
          _
      $region32: #{tpu_custom_call.1} parent=5 // pred_fallthru
        _
      %p657 = scmp.le.s32.totalorder 2, %s21
      // Predicated region
      $region45: #{tpu_custom_call.1} parent=5 // pred_check
        %p658 = pneg %p657
      $region46: #{tpu_custom_call.1} parent=5 // pred_check_branch
        %660 = sbr.rel (%p658) target = $region48
      $region47: #{tpu_custom_call.1} parent=5 // pred_region
        %s661 = ssub.s32 %s21, 2
        // Predicated region
        $region49: #{tpu_custom_call.1} parent=47 // pred_check
          %p662 = pneg %p118
        $region50: #{tpu_custom_call.1} parent=47 // pred_check_branch
          %664 = sbr.rel (%p662) target = $region52
        $region51: #{tpu_custom_call.1} parent=47 // pred_region
          %s665 = sand.u32 %s103, 1
          %s666 = scalar_lea.sflag [#allocation6], %s665
          %s667 = sand.u32 %s103, 1
          %s668 = smul.addr %s667, 8
          %s669 = scalar_lea.vmem [#allocation9], %s668
          %670 = dma.done %s666, 128
        $region52: #{tpu_custom_call.1} parent=47 // pred_fallthru
          _
      $region48: #{tpu_custom_call.1} parent=5 // pred_fallthru
        _
    $region6: #{tpu_custom_call.1} parent=1 // loop_footer
      %s25 = sadd.s32 1, %s21
    $region7: #{tpu_custom_call.1} parent=1 // loop_footer_branch
      %20 = sbr.rel target = $region3
    $region8: #{tpu_custom_call.1} parent=1 // loop_exit
      _
    %671 = vsyncpa [#allocation5], 1
    %s672 = scalar_lea.sflag [#allocation5], 1
    %673 = vsyncpa %s672, 1
    %674 = vsyncpa [#allocation8], 1
    %675 = vsyncpa [#allocation6], 1
    %s676 = scalar_lea.sflag [#allocation6], 1
    %677 = vsyncpa %s676, 1

</llo_original>
